<compile_context>
chip_gen: v5e
topology: v5e:2x2
jax: 0.10.0
libtpu: 0.0.40
codegen_flags: <defaults>
</compile_context>

<pallas_src>
import jax
import jax.numpy as jnp
from jax.experimental import pallas as pl
from jax.experimental.pallas import tpu as pltpu

_EPS = 1e-12  # matches F.normalize default eps

# Tile-size caps (multiples of 8/128 so ragged grids stay layout-legal; full
# dims are used directly when smaller than the cap).
_TM_CAP = 512
_TN_CAP = 256


def _cosine_kernel(x_ref, wt_ref, xinv_ref, winv_ref, o_ref, acc_ref):
    """One (tm, tn) output tile, accumulated over the K grid axis.

    x_ref    : (tm, tk)  operand tile (f32 or bf16)
    wt_ref   : (tk, tn)  pre-transposed weight tile (f32 or bf16)
    xinv_ref : (tm, 1)   f32 inverse L2 norm of x rows
    winv_ref : (1, tn)   f32 scale * inverse L2 norm of weight rows
    o_ref    : (tm, tn)  output tile
    acc_ref  : (tm, tn)  f32 accumulator scratch (resident across K)
    """
    kk = pl.program_id(2)

    @pl.when(kk == 0)
    def _init():
        acc_ref[...] = jnp.zeros_like(acc_ref)

    # Main MXU contraction; f32 accumulation regardless of operand dtype.
    acc_ref[...] += jnp.dot(x_ref[...], wt_ref[...],
                            preferred_element_type=jnp.float32)

    @pl.when(kk == pl.num_programs(2) - 1)
    def _finalize():
        # Rank-1 scaling folds both normalizations and `scale` (already in
        # winv) into the small output tile.
        o_ref[...] = (xinv_ref[...] * (winv_ref[...] * acc_ref[...])).astype(
            o_ref.dtype)


def _vmem_cap_bytes():
    try:
        return int(pltpu.get_tpu_info().vmem_capacity_bytes)
    except Exception:
        return 64 * 1024 * 1024  # conservative (v7x) fallback


def cosine_classifier(x, weight, scale=20.0, *, use_bf16=False,
                      tm_cap=_TM_CAP, tn_cap=_TN_CAP, tk_cap=None,
                      out_dtype=jnp.float32):
    """x: (N, indim), weight: (outdim, indim) -> (N, outdim) cosine logits."""
    n, k = x.shape
    outdim, k_w = weight.shape
    assert k == k_w, "feature dims must match"

    x_f32 = x.astype(jnp.float32)
    w_f32 = weight.astype(jnp.float32)

    # Inverse L2 row norms, computed once in the wrapper (f.normalize eps
    # semantics: x / max(||x||, eps)).  `scale` is folded into w_inv.
    x_inv = 1.0 / jnp.maximum(
        jnp.sqrt(jnp.sum(x_f32 * x_f32, axis=1, keepdims=True)), _EPS)  # (N, 1)
    w_inv = (float(scale) / jnp.maximum(
        jnp.sqrt(jnp.sum(w_f32 * w_f32, axis=1)), _EPS)).reshape(1, outdim)

    # Pre-transpose weight once so the kernel contraction is plain (M,K)x(K,N).
    w_t = w_f32.T  # (K, outdim)

    if use_bf16:
        x_in = x_f32.astype(jnp.bfloat16)
        w_in = w_t.astype(jnp.bfloat16)
        in_bytes = 2
    else:
        x_in, w_in = x_f32, w_t
        in_bytes = 4
    out_bytes = jnp.dtype(out_dtype).itemsize

    tm = n if n <= tm_cap else tm_cap
    tn = outdim if outdim <= tn_cap else tn_cap

    # Generation-aware VMEM budget (<= ~85% of physical VMEM: ~54 MiB on v7x,
    # ~108 MiB on v5e/v6e).
    vmem_budget = int(0.85 * _vmem_cap_bytes())

    # Fixed VMEM cost: double-buffered output, f32 accumulator, norm vectors
    # (lane/sublane padded), plus compiler headroom.
    fixed = (2 * tm * tn * out_bytes + tm * tn * 4
             + 2 * (tm * 128 * 4 + 8 * tn * 4) + (2 << 20))
    avail = max(vmem_budget - fixed, 4 * 1024 * 1024)

    # Size tk so double-buffered (tm,tk) + (tk,tn) input tiles fit the budget.
    tk_fit = avail // (2 * (tm + tn) * in_bytes)
    if tk_cap is not None:
        tk_fit = min(tk_fit, tk_cap)
    if k <= tk_fit:
        tk = k
        k_pad = k
    else:
        tk = max(128, (tk_fit // 128) * 128)
        k_pad = pl.cdiv(k, tk) * tk

    # Zero-pad K when tiled so ragged-K blocks never feed garbage into the
    # accumulation (zeros are a no-op for the dot product).
    if k_pad != k:
        x_in = jnp.pad(x_in, ((0, 0), (0, k_pad - k)))
        w_in = jnp.pad(w_in, ((0, k_pad - k), (0, 0)))

    gi = pl.cdiv(n, tm)
    gj = pl.cdiv(outdim, tn)
    gk = k_pad // tk
    grid = (gi, gj, gk)

    vmem_need = (2 * (tm * tk + tk * tn) * in_bytes
                 + 2 * tm * tn * out_bytes + tm * tn * 4
                 + 2 * (tm * 128 * 4 + 8 * tn * 4) + (2 << 20))
    vmem_limit = int(min(max(vmem_need, 32 * 1024 * 1024), vmem_budget))

    # Realistic traffic: weight re-streamed gi times, x re-streamed gj times.
    cost = pl.CostEstimate(
        flops=2 * n * outdim * k,
        bytes_accessed=(in_bytes * (gj * n * k_pad + gi * outdim * k_pad)
                        + out_bytes * n * outdim + 4 * (n + outdim)),
        transcendentals=0,
    )

    return pl.pallas_call(
        _cosine_kernel,
        out_shape=jax.ShapeDtypeStruct((n, outdim), out_dtype),
        grid=grid,
        in_specs=[
            pl.BlockSpec((tm, tk), lambda i, j, kk: (i, kk)),   # x
            pl.BlockSpec((tk, tn), lambda i, j, kk: (kk, j)),   # weight.T
            pl.BlockSpec((tm, 1), lambda i, j, kk: (i, 0)),     # x_inv
            pl.BlockSpec((1, tn), lambda i, j, kk: (0, j)),     # scale * w_inv
        ],
        out_specs=pl.BlockSpec((tm, tn), lambda i, j, kk: (i, j)),
        scratch_shapes=[pltpu.VMEM((tm, tn), jnp.float32)],
        compiler_params=pltpu.CompilerParams(
            # Both spatial axes parallel (uses both v7x TensorCores even when
            # N fits a single tile); K reduction stays "arbitrary".
            dimension_semantics=("parallel", "parallel", "arbitrary"),
            vmem_limit_bytes=vmem_limit,
        ),
        cost_estimate=cost,
    )(x_in, w_in, x_inv, w_inv)


def cosine_classifier_ref(x, weight, scale=20.0):
    """Pure-JAX reference mirroring the PyTorch module."""
    x_n = x / jnp.maximum(jnp.linalg.norm(x, axis=1, keepdims=True), _EPS)
    w_n = weight / jnp.maximum(jnp.linalg.norm(weight, axis=1, keepdims=True), _EPS)
    cos = jnp.dot(x_n, w_n.T, precision=jax.lax.Precision.HIGHEST)
    return scale * cos


if __name__ == "__main__":
    scale = 20.0
    key = jax.random.PRNGKey(0)

    def make_inputs(batch, indim, outdim):
        kx, kw = jax.random.split(jax.random.fold_in(key, batch * 131 + indim))
        x = jax.random.normal(kx, (batch, indim), dtype=jnp.float32)
        # Deterministic init matching torch: N(0, sqrt(2/indim)).
        w = jax.random.normal(kw, (outdim, indim), dtype=jnp.float32) * jnp.sqrt(
            2.0 / indim)
        return x, w

    # (batch, indim, outdim): a small single-tile case and a multi-tile case
    # with ragged boundaries in both output grid axes.
    for (batch, indim, outdim) in [(8, 32, 16), (272, 256, 384)]:
        x, w = make_inputs(batch, indim, outdim)
        out = jax.block_until_ready(cosine_classifier(x, w, scale=scale))
        ref = cosine_classifier_ref(x, w, scale=scale)
        assert out.shape == (batch, outdim)
        assert jnp.allclose(out, ref, atol=5e-3, rtol=5e-3), (
            f"mismatch vs reference for shape {(batch, indim, outdim)}")

    # Forced K-tiling path (tk_cap=128, K=320 -> zero-padded to 384) to
    # exercise the accumulator init/finalize and K padding.
    x, w = make_inputs(64, 320, 192)
    out = jax.block_until_ready(
        cosine_classifier(x, w, scale=scale, tk_cap=128))
    ref = cosine_classifier_ref(x, w, scale=scale)
    assert jnp.allclose(out, ref, atol=5e-3, rtol=5e-3), "K-tiled path mismatch"

    # bf16 operand-streaming path (casts happen in the wrapper); looser
    # tolerance for bf16 quantization of the operands.
    x, w = make_inputs(272, 256, 384)
    out_bf16 = jax.block_until_ready(
        cosine_classifier(x, w, scale=scale, use_bf16=True))
    ref = cosine_classifier_ref(x, w, scale=scale)
    assert jnp.allclose(out_bf16, ref, atol=0.25, rtol=0.05), "bf16 path mismatch"

    print("KERNEL_OK")
</pallas_src>

<mosaic_0001>
module attributes {stable_mosaic.version = 11 : i64} {
  func.func @_cosine_kernel(%arg0: i32, %arg1: i32, %arg2: i32, %arg3: memref<8x32xf32, #tpu.memory_space<vmem>>, %arg4: memref<32x16xf32, #tpu.memory_space<vmem>>, %arg5: memref<8x1xf32, #tpu.memory_space<vmem>>, %arg6: memref<1x16xf32, #tpu.memory_space<vmem>>, %arg7: memref<8x16xf32, #tpu.memory_space<vmem>>, %arg8: memref<8x16xf32, #tpu.memory_space<vmem>>) attributes {dimension_semantics = [#tpu.dimension_semantics<parallel>, #tpu.dimension_semantics<parallel>, #tpu.dimension_semantics<arbitrary>], iteration_bounds = array<i64: 1, 1, 1>, scalar_prefetch = 0 : i64, scratch_operands = 1 : i64, tpu.core_type = #tpu.core_type<tc>, window_params = [{transform_indices = @transform_0, window_bounds = array<i64: 8, 32>}, {transform_indices = @transform_1, window_bounds = array<i64: 32, 16>}, {transform_indices = @transform_2, window_bounds = array<i64: 8, 1>}, {transform_indices = @transform_3, window_bounds = array<i64: 1, 16>}, {transform_indices = @transform_4, window_bounds = array<i64: 8, 16>}]} {
    %c0_i32 = arith.constant 0 : i32
    %0 = arith.cmpi eq, %arg2, %c0_i32 : i32
    %1 = arith.extui %0 : i1 to i32
    %c0_i32_0 = arith.constant 0 : i32
    %2 = arith.cmpi ne, %1, %c0_i32_0 : i32
    scf.if %2 {
      %cst_10 = arith.constant 0.000000e+00 : f32
      %12 = vector.broadcast %cst_10 : f32 to vector<8x16xf32>
      %c0_11 = arith.constant 0 : index
      %c0_12 = arith.constant 0 : index
      %13 = vector.load %arg8[%c0_11, %c0_12] : memref<8x16xf32, #tpu.memory_space<vmem>>, vector<8x16xf32>
      tpu.vector_store %arg8[%c0_11, %c0_12], %12 {strides = array<i32>} : memref<8x16xf32, #tpu.memory_space<vmem>>, vector<8x16xf32>,
    } else {
    }
    %c0 = arith.constant 0 : index
    %c0_1 = arith.constant 0 : index
    %3 = vector.load %arg8[%c0, %c0_1] : memref<8x16xf32, #tpu.memory_space<vmem>>, vector<8x16xf32>
    %c0_2 = arith.constant 0 : index
    %c0_3 = arith.constant 0 : index
    %4 = vector.load %arg3[%c0_2, %c0_3] : memref<8x32xf32, #tpu.memory_space<vmem>>, vector<8x32xf32>
    %c0_4 = arith.constant 0 : index
    %c0_5 = arith.constant 0 : index
    %5 = vector.load %arg4[%c0_4, %c0_5] : memref<32x16xf32, #tpu.memory_space<vmem>>, vector<32x16xf32>
    %cst = arith.constant dense<0.000000e+00> : vector<8x16xf32>
    %6 = tpu.matmul %4, %5, %cst {dimension_numbers = #tpu.dot_dimension_numbers<[1], [0], [0], [1], [0, 0, 1, 1], [], []>} : vector<8x32xf32>, vector<32x16xf32>, vector<8x16xf32> -> vector<8x16xf32>
    %7 = arith.addf %3, %6 : vector<8x16xf32>
    %c0_6 = arith.constant 0 : index
    %c0_7 = arith.constant 0 : index
    %8 = vector.load %arg8[%c0_6, %c0_7] : memref<8x16xf32, #tpu.memory_space<vmem>>, vector<8x16xf32>
    tpu.vector_store %arg8[%c0_6, %c0_7], %7 {strides = array<i32>} : memref<8x16xf32, #tpu.memory_space<vmem>>, vector<8x16xf32>,
    %c0_i32_8 = arith.constant 0 : i32
    %9 = arith.cmpi eq, %arg2, %c0_i32_8 : i32
    %10 = arith.extui %9 : i1 to i32
    %c0_i32_9 = arith.constant 0 : i32
    %11 = arith.cmpi ne, %10, %c0_i32_9 : i32
    scf.if %11 {
      %c0_10 = arith.constant 0 : index
      %c0_11 = arith.constant 0 : index
      %12 = vector.load %arg5[%c0_10, %c0_11] : memref<8x1xf32, #tpu.memory_space<vmem>>, vector<8x1xf32>
      %c0_12 = arith.constant 0 : index
      %c0_13 = arith.constant 0 : index
      %13 = vector.load %arg6[%c0_12, %c0_13] : memref<1x16xf32, #tpu.memory_space<vmem>>, vector<1x16xf32>
      %c0_14 = arith.constant 0 : index
      %c0_15 = arith.constant 0 : index
      %14 = vector.load %arg8[%c0_14, %c0_15] : memref<8x16xf32, #tpu.memory_space<vmem>>, vector<8x16xf32>
      %15 = vector.broadcast %13 : vector<1x16xf32> to vector<8x16xf32>
      %16 = arith.mulf %15, %14 : vector<8x16xf32>
      %17 = vector.broadcast %12 : vector<8x1xf32> to vector<8x16xf32>
      %18 = arith.mulf %17, %16 : vector<8x16xf32>
      %c0_16 = arith.constant 0 : index
      %c0_17 = arith.constant 0 : index
      %19 = vector.load %arg7[%c0_16, %c0_17] : memref<8x16xf32, #tpu.memory_space<vmem>>, vector<8x16xf32>
      tpu.vector_store %arg7[%c0_16, %c0_17], %18 {strides = array<i32>} : memref<8x16xf32, #tpu.memory_space<vmem>>, vector<8x16xf32>,
    } else {
    }
    return
  }
  func.func @transform_0(%arg0: i32, %arg1: i32, %arg2: i32) -> (i32, i32) {
    %c0_i32 = arith.constant 0 : i32
    return %arg0, %arg2 : i32, i32
  }
  func.func @transform_1(%arg0: i32, %arg1: i32, %arg2: i32) -> (i32, i32) {
    %c0_i32 = arith.constant 0 : i32
    return %arg2, %arg1 : i32, i32
  }
  func.func @transform_2(%arg0: i32, %arg1: i32, %arg2: i32) -> (i32, i32) {
    %c0_i32 = arith.constant 0 : i32
    %c0_i32_0 = arith.constant 0 : i32
    return %arg0, %c0_i32 : i32, i32
  }
  func.func @transform_3(%arg0: i32, %arg1: i32, %arg2: i32) -> (i32, i32) {
    %c0_i32 = arith.constant 0 : i32
    %c0_i32_0 = arith.constant 0 : i32
    return %c0_i32, %arg1 : i32, i32
  }
  func.func @transform_4(%arg0: i32, %arg1: i32, %arg2: i32) -> (i32, i32) {
    %c0_i32 = arith.constant 0 : i32
    return %arg0, %arg1 : i32, i32
  }
}

</mosaic_0001>

<llo_original>
// kernel: tpu_custom_call.1
$region0: #{tpu_custom_call.1}
  #allocation0 [shape = 'u32[]', space=smem, size = 0x4, offset = 0x4, fixed_abs, tag = 'smem constant byte address 0x4 - core index']
  #allocation1 [shape = 'u32[72,128]{1,0:T(1,128)}', space=vmem, size = 0x9000, scoped, tag = 'internal scratch']
  #allocation2 [shape = 'f32[8,16]{1,0:T(8,128)}', space=vmem, size = 0x1000, scoped, tag = 'scratch operand']
  %s0 = inlined_call_operand.vmem [shape: f32[8,32], index: 0, kind: input, shape index: {}]
  %s1 = inlined_call_operand.vmem [shape: f32[32,16], index: 1, kind: input, shape index: {}]
  %s2 = inlined_call_operand.vmem [shape: f32[8,1], index: 2, kind: input, shape index: {}]
  %s3 = inlined_call_operand.vmem [shape: f32[1,16], index: 3, kind: input, shape index: {}]
  %s4 = inlined_call_operand.hbm [shape: f32[8,16], index: 4, kind: output, shape index: {}]
  %s5 = sld [smem:[#allocation0]]
  $region34: #{tpu_custom_call.1} parent=0
    _
  %s7 = ssub.s32 1, %s5
  %s8 = scalar_select 0, %s7, %s5
  $region1: #{tpu_custom_call.1} parent=0
    #allocation3 [shape = 'u8[4096]{0}', space=vmem, size = 0x1000, scoped, tag = 'output window, operand 0, single buffered']
    #allocation4 [shape = 's32[1]{0}', space=sflag, size = 0x4, scoped, tag = 'scoped memory for tpu_custom_call.1']
    %9 = vsyncpa [#allocation4], 0
    // Predicated region
    $region2: #{tpu_custom_call.1} parent=1 // pred_check
      _
    $region3: #{tpu_custom_call.1} parent=1 // pred_check_branch
      %11 = sbr.rel (0) target = $region5
    $region4: #{tpu_custom_call.1} parent=1 // pred_region
      _
    $region5: #{tpu_custom_call.1} parent=1 // pred_fallthru
      _
    // Predicated region
    $region6: #{tpu_custom_call.1} parent=1 // pred_check
      _
    $region7: #{tpu_custom_call.1} parent=1 // pred_check_branch
      %13 = sbr.rel (0) target = $region9
    $region8: #{tpu_custom_call.1} parent=1 // pred_region
      _
    $region9: #{tpu_custom_call.1} parent=1 // pred_fallthru
      _
    // Predicated region
    $region10: #{tpu_custom_call.1} parent=1 // pred_check
      _
    $region11: #{tpu_custom_call.1} parent=1 // pred_check_branch
      %15 = sbr.rel (0) target = $region13
    $region12: #{tpu_custom_call.1} parent=1 // pred_region
      _
    $region13: #{tpu_custom_call.1} parent=1 // pred_fallthru
      _
    // Predicated region
    $region14: #{tpu_custom_call.1} parent=1 // pred_check
      _
    $region15: #{tpu_custom_call.1} parent=1 // pred_check_branch
      %17 = sbr.rel (0) target = $region17
    $region16: #{tpu_custom_call.1} parent=1 // pred_region
      _
    $region17: #{tpu_custom_call.1} parent=1 // pred_fallthru
      _
    %p18 = scmp.eq.s32.totalorder 0, 0
    // Predicated region
    $region18: #{tpu_custom_call.1} parent=1 // pred_check
      %p19 = pneg %p18
    $region19: #{tpu_custom_call.1} parent=1 // pred_check_branch
      %21 = sbr.rel (%p19) target = $region21
    $region20: #{tpu_custom_call.1} parent=1 // pred_region
      %vm22 = vcmask 130048
      %23 = vst.msk [vmem:[#allocation2] sm:$0xff] %vm22, 0.0
    $region21: #{tpu_custom_call.1} parent=1 // pred_fallthru
      _
    %v24 = vld [vmem:[#allocation2] sm:$0xff]
    %v25 = vld [vmem:[%s0] sm:$0xff]
    %v26 = vld [vmem:[%s1] sm:$0xff]
    %v27 = vld [vmem:[%s1 + $0x8] sm:$0xff]
    %v28 = vld [vmem:[%s1 + $0x10] sm:$0xff]
    %v29 = vld [vmem:[%s1 + $0x18] sm:$0xff]
    %vm30 = vcmask 261120
    %v32 = vsel %vm30, %v25, 0
    %34 = vmatpush.msra.mxu0 0.0
    %35 = vmatpush.msra.mxu0 0.0
    %36 = vmatpush.msra.mxu0 0.0
    %37 = vmatpush.msra.mxu0 0.0
    %38 = vmatpush.msra.mxu0 0.0
    %39 = vmatpush.msra.mxu0 0.0
    %40 = vmatpush.msra.mxu0 0.0
    %41 = vmatpush.msra.mxu0 0.0
    %42 = vmatpush.msra.mxu0 0.0
    %43 = vmatpush.msra.mxu0 0.0
    %44 = vmatpush.msra.mxu0 0.0
    %45 = vmatpush.msra.mxu0 0.0
    %46 = vmatpush.msra.mxu0 %v29
    %47 = vmatpush.msra.mxu0 %v28
    %48 = vmatpush.msra.mxu0 %v27
    %49 = vmatpush.msra.mxu0 %v26
    %50 = vmatmul.f32.gmra.mxu0 %v32
    %v51 = vpop.f32.mrf.mxu0
    %v52 = vadd.f32 0.0, %v51
    %53 = vdwg.mxu0
    %v54 = vadd.f32 %v24, %v52
    %vm55 = vcmask 130048
    %56 = vst.msk [vmem:[#allocation2] sm:$0xff] %vm55, %v54
    // Predicated region
    $region22: #{tpu_custom_call.1} parent=1 // pred_check
      %p57 = pneg %p18
    $region23: #{tpu_custom_call.1} parent=1 // pred_check_branch
      %59 = sbr.rel (%p57) target = $region25
    $region24: #{tpu_custom_call.1} parent=1 // pred_region
      %v60 = vld [vmem:[%s2] sm:$0xff]
      %v61 = vld [vmem:[%s3] sm:$0x1]
      %v62 = vld [vmem:[#allocation2] sm:$0xff]
      %v64 = vperm.slane %v61, 0
      %v66 = vmul.f32 %v64, %v62
      %68 = vset.pattern.permute.xlu0 0
      %69 = vperm.xlu0 %68, %v60
      %v70 = vpop.permute.xlu0 %69
      %v72 = vmul.f32 %v70, %v66
      %73 = vst.msk [vmem:[#allocation3] sm:$0xff] %vm55, %v72
    $region25: #{tpu_custom_call.1} parent=1 // pred_fallthru
      _
    // Predicated region
    $region26: #{tpu_custom_call.1} parent=1 // pred_check
      _
    $region27: #{tpu_custom_call.1} parent=1 // pred_check_branch
      %75 = sbr.rel (0) target = $region29
    $region28: #{tpu_custom_call.1} parent=1 // pred_region
      %77 = vsyncadd [#allocation4], 0
      %s79 = sshll.u32 [#allocation3], 4
      %s80 = int_to_ptr.vmem [resolvable:$true] %s79
      %s81 = sshll.u32 %s4, 4
      %s82 = int_to_ptr.hbm [resolvable:$true] %s81
      %84 = dma.vmem_to_hbm [thread:$0]  %s80, 128, %s82, [#allocation4]
    $region29: #{tpu_custom_call.1} parent=1 // pred_fallthru
      _
    // Predicated region
    $region30: #{tpu_custom_call.1} parent=1 // pred_check
      _
    $region31: #{tpu_custom_call.1} parent=1 // pred_check_branch
      %86 = sbr.rel (0) target = $region33
    $region32: #{tpu_custom_call.1} parent=1 // pred_region
      %88 = dma.done [#allocation4], 128
    $region33: #{tpu_custom_call.1} parent=1 // pred_fallthru
      _
    %89 = vsyncpa [#allocation4], 1

</llo_original>
